<compile_context>
chip_gen: v7x
topology: tpu7x:2x2x1
jax: 0.10.0
libtpu: 0.0.40
codegen_flags: <defaults>
</compile_context>

<pallas_src>
import functools

import jax
import jax.numpy as jnp
from jax.experimental import pallas as pl
from jax.experimental.pallas import tpu as pltpu


# ----------------------------- Pallas kernel --------------------------------
def _dyn_conv_kernel(x_ref, w_ref, b_ref, o_ref, *, kh, kw, dh, dw, tile_h, out_w):
    """One (batch sample, output-row tile) grid step.

    x_ref: (1, C_in, Hp, Wp)        padded input, resident across row tiles
    w_ref: (1, kh*kw, C_out, C_in)  per-offset weight slices
    b_ref: (1, C_out, 1)
    o_ref: (1, C_out, tile_h, out_w)
    """
    t = pl.program_id(1)
    row0 = t * tile_h                        # first output row of this tile
    bias = b_ref[0].astype(jnp.float32)      # (C_out, 1)

    def row_body(r, carry):
        acc = None
        for i in range(kh):                  # static unroll over kernel offsets
            src_row = row0 + r + i * dh      # padded input row (stride-1 conv)
            for j in range(kw):
                xs = x_ref[0, :, src_row, pl.ds(j * dw, out_w)]   # (C_in, out_w)
                wk = w_ref[0, i * kw + j]                          # (C_out, C_in)
                part = jnp.dot(wk, xs, preferred_element_type=jnp.float32)
                acc = part if acc is None else acc + part
        o_ref[0, :, r, :] = (acc + bias).astype(o_ref.dtype)
        return carry

    jax.lax.fori_loop(0, tile_h, row_body, 0)


def _pick_row_tile(out_h, out_w, c_out, itemsize=4, budget_bytes=2 << 20):
    """Largest multiple-of-8 divisor of out_h whose output tile fits the budget."""
    best = 0
    for th in range(8, out_h + 1, 8):
        if out_h % th == 0 and c_out * th * out_w * itemsize <= budget_bytes:
            best = th
    if best == 0:
        best = out_h        # full-extent block is always a legal (8,128)-exempt block
    return best


def _dyn_conv_pallas(x_pad, w, b, *, kh, kw, dh, dw, out_h, out_w, tile_h,
                     out_dtype, vmem_limit_bytes):
    B, C_in, Hp, Wp = x_pad.shape
    C_out = w.shape[2]
    n_row_tiles = out_h // tile_h

    kernel = functools.partial(_dyn_conv_kernel, kh=kh, kw=kw, dh=dh, dw=dw,
                               tile_h=tile_h, out_w=out_w)

    out_bytes = B * C_out * out_h * out_w * jnp.dtype(out_dtype).itemsize
    cost = pl.CostEstimate(
        flops=2 * B * out_h * out_w * (C_in * kh * kw) * C_out,
        transcendentals=0,
        bytes_accessed=int(x_pad.size * x_pad.dtype.itemsize
                           + w.size * w.dtype.itemsize
                           + b.size * b.dtype.itemsize
                           + out_bytes))

    return pl.pallas_call(
        kernel,
        out_shape=jax.ShapeDtypeStruct((B, C_out, out_h, out_w), out_dtype),
        grid_spec=pltpu.PrefetchScalarGridSpec(
            num_scalar_prefetch=0,
            grid=(B, n_row_tiles),
            in_specs=[
                # whole padded sample, resident in VMEM across row tiles
                pl.BlockSpec((1, C_in, Hp, Wp), lambda bb, t: (bb, 0, 0, 0)),
                pl.BlockSpec((1, kh * kw, C_out, C_in), lambda bb, t: (bb, 0, 0, 0)),
                pl.BlockSpec((1, C_out, 1), lambda bb, t: (bb, 0, 0)),
            ],
            out_specs=pl.BlockSpec((1, C_out, tile_h, out_w),
                                   lambda bb, t: (bb, 0, t, 0)),
        ),
        compiler_params=pltpu.CompilerParams(
            dimension_semantics=("parallel", "parallel"),
            vmem_limit_bytes=vmem_limit_bytes),
        cost_estimate=cost,
    )(x_pad, w, b)


# ------------------------------- JAX glue ------------------------------------
def _periodic_pad(x, pad_h, pad_w):
    # Matches PeriodicPad1d(pad_w, dim=-1) then PeriodicPad1d(pad_h, dim=-2).
    if pad_w > 0:
        x = jnp.concatenate([x[..., -pad_w:], x, x[..., :pad_w]], axis=-1)
    if pad_h > 0:
        x = jnp.concatenate([x[..., -pad_h:, :], x, x[..., :pad_h, :]], axis=-2)
    return x


class DynamicConv2dPallas:
    """JAX/Pallas equivalent of the PyTorch DynamicConv2d module."""

    def __init__(self, in_channels, out_channels, kernel_size, stride=1,
                 padding=0, dilation=1, groups=1, boundary_cond="periodic",
                 compute_dtype=jnp.float32, vmem_limit_bytes=64 * 1024 * 1024):
        as_pair = lambda v: (v, v) if isinstance(v, int) else tuple(v)
        self.kernel_size = as_pair(kernel_size)
        self.stride = as_pair(stride)
        self.padding = as_pair(padding)
        self.dilation = as_pair(dilation)
        self.in_channels = in_channels
        self.out_channels = out_channels
        self.boundary_cond = boundary_cond
        self.groups = groups            # accepted for API parity; reference forward ignores it
        self.compute_dtype = compute_dtype   # set to jnp.bfloat16 on v6e/v7x to halve DMA bytes
        self.vmem_limit_bytes = vmem_limit_bytes
        self.use_pad = ((self.padding[0] > 0 or self.padding[1] > 0)
                        and boundary_cond == "periodic")
        if self.use_pad:
            assert self.padding[0] == (self.kernel_size[0] - 1) // 2
            assert self.padding[1] == (self.kernel_size[1] - 1) // 2

    @functools.partial(jax.jit, static_argnums=0)
    def __call__(self, x, weight, bias=None):
        kh, kw = self.kernel_size
        dh, dw = self.dilation
        sh, sw = self.stride
        B, C_in, H, W = x.shape

        y = _periodic_pad(x, self.padding[0], self.padding[1]) if self.use_pad else x
        Hp, Wp = y.shape[-2], y.shape[-1]
        out_h = Hp - dh * (kh - 1)      # stride-1 extents (stride applied below)
        out_w = Wp - dw * (kw - 1)

        # weight K axis is ordered (c, kh, kw)  ->  (B, kh*kw, C_out, C_in)
        w = weight.reshape(B, C_in, kh, kw, self.out_channels)
        w = jnp.transpose(w, (0, 2, 3, 4, 1)).reshape(
            B, kh * kw, self.out_channels, C_in)

        if bias is None:
            b = jnp.zeros((B, self.out_channels, 1), dtype=jnp.float32)
        else:
            b = bias.reshape(B, self.out_channels, 1).astype(jnp.float32)

        y = y.astype(self.compute_dtype)
        w = w.astype(self.compute_dtype)

        tile_h = _pick_row_tile(out_h, out_w, self.out_channels,
                                itemsize=jnp.dtype(x.dtype).itemsize)
        out = _dyn_conv_pallas(y, w, b, kh=kh, kw=kw, dh=dh, dw=dw,
                               out_h=out_h, out_w=out_w, tile_h=tile_h,
                               out_dtype=x.dtype,
                               vmem_limit_bytes=self.vmem_limit_bytes)

        if sh > 1 or sw > 1:
            # TODO(synk): stride>1 is realized by subsampling the stride-1 result
            # (the reference module's final .view() is only consistent for stride=1).
            out = out[:, :, ::sh, ::sw]
        return out


# --------------------------------- main ---------------------------------------
if __name__ == "__main__":
    B, C_in, C_out, H, W = 2, 4, 8, 16, 16
    ksize, pad = 3, 1

    key = jax.random.PRNGKey(0)
    kx, kw_, kb = jax.random.split(key, 3)
    x = jax.random.normal(kx, (B, C_in, H, W), dtype=jnp.float32)
    weight = jax.random.normal(kw_, (B, C_in * ksize * ksize, C_out),
                               dtype=jnp.float32) * 0.1
    bias = jax.random.normal(kb, (B, C_out), dtype=jnp.float32) * 0.1

    mod = DynamicConv2dPallas(C_in, C_out, ksize, stride=1, padding=pad,
                              dilation=1, boundary_cond="periodic")
    out = jax.block_until_ready(mod(x, weight, bias))
    assert out.shape == (B, C_out, H, W)

    # Pure-JAX im2col reference for a numerical sanity check (K ordered (c, i, j)).
    yp = _periodic_pad(x, pad, pad)
    cols = [yp[:, :, i:i + H, j:j + W] for i in range(ksize) for j in range(ksize)]
    patches = jnp.stack(cols, axis=2).reshape(B, C_in * ksize * ksize, H * W)
    ref = jnp.einsum("bkl,bkc->bcl", patches, weight) + bias[:, :, None]
    ref = ref.reshape(B, C_out, H, W)
    assert jnp.allclose(out, ref, atol=1e-4, rtol=1e-4), \
        float(jnp.max(jnp.abs(out - ref)))

    print("KERNEL_OK")
</pallas_src>

<mosaic_0001>
module attributes {stable_mosaic.version = 11 : i64} {
  func.func @_dyn_conv_kernel(%arg0: i32, %arg1: i32, %arg2: memref<1x4x18x18xf32, #tpu.memory_space<vmem>>, %arg3: memref<1x9x8x4xf32, #tpu.memory_space<vmem>>, %arg4: memref<1x8x1xf32, #tpu.memory_space<vmem>>, %arg5: memref<1x8x16x16xf32, #tpu.memory_space<vmem>>) attributes {dimension_semantics = [#tpu.dimension_semantics<parallel>, #tpu.dimension_semantics<parallel>], iteration_bounds = array<i64: 2, 1>, scalar_prefetch = 0 : i64, scratch_operands = 0 : i64, tpu.core_type = #tpu.core_type<tc>, window_params = [{transform_indices = @transform_0, window_bounds = array<i64: 1, 4, 18, 18>}, {transform_indices = @transform_1, window_bounds = array<i64: 1, 9, 8, 4>}, {transform_indices = @transform_2, window_bounds = array<i64: 1, 8, 1>}, {transform_indices = @transform_3, window_bounds = array<i64: 1, 8, 16, 16>}]} {
    %c16_i32 = arith.constant 16 : i32
    %0 = arith.muli %arg1, %c16_i32 : i32
    %c0 = arith.constant 0 : index
    %c0_0 = arith.constant 0 : index
    %c0_1 = arith.constant 0 : index
    %1 = vector.load %arg4[%c0, %c0_0, %c0_1] : memref<1x8x1xf32, #tpu.memory_space<vmem>>, vector<1x8x1xf32>
    %2 = vector.shape_cast %1 : vector<1x8x1xf32> to vector<8x1xf32>
    %c0_i32 = arith.constant 0 : i32
    %c16_i32_2 = arith.constant 16 : i32
    %3 = arith.addi %c0_i32, %c16_i32_2 : i32
    %c1_i32 = arith.constant 1 : i32
    scf.for %arg6 = %c0_i32 to %3 step %c1_i32  : i32 {
      %4 = arith.addi %0, %arg6 : i32
      %c0_i32_4 = arith.constant 0 : i32
      %5 = arith.addi %4, %c0_i32_4 : i32
      %c0_5 = arith.constant 0 : index
      %c0_6 = arith.constant 0 : index
      %6 = arith.index_cast %5 : i32 to index
      %c0_7 = arith.constant 0 : index
      %7 = vector.load %arg2[%c0_5, %c0_6, %6, %c0_7] : memref<1x4x18x18xf32, #tpu.memory_space<vmem>>, vector<1x4x1x16xf32>
      %8 = vector.shape_cast %7 : vector<1x4x1x16xf32> to vector<4x16xf32>
      %c0_8 = arith.constant 0 : index
      %c0_9 = arith.constant 0 : index
      %c0_10 = arith.constant 0 : index
      %c0_11 = arith.constant 0 : index
      %9 = vector.load %arg3[%c0_8, %c0_9, %c0_10, %c0_11] : memref<1x9x8x4xf32, #tpu.memory_space<vmem>>, vector<1x1x8x4xf32>
      %10 = vector.shape_cast %9 : vector<1x1x8x4xf32> to vector<8x4xf32>
      %cst = arith.constant dense<0.000000e+00> : vector<8x16xf32>
      %11 = tpu.matmul %10, %8, %cst {dimension_numbers = #tpu.dot_dimension_numbers<[1], [0], [0], [1], [0, 0, 1, 1], [], []>} : vector<8x4xf32>, vector<4x16xf32>, vector<8x16xf32> -> vector<8x16xf32>
      %c0_12 = arith.constant 0 : index
      %c0_13 = arith.constant 0 : index
      %12 = arith.index_cast %5 : i32 to index
      %c1 = arith.constant 1 : index
      %13 = vector.load %arg2[%c0_12, %c0_13, %12, %c1] : memref<1x4x18x18xf32, #tpu.memory_space<vmem>>, vector<1x4x1x16xf32>
      %14 = vector.shape_cast %13 : vector<1x4x1x16xf32> to vector<4x16xf32>
      %c0_14 = arith.constant 0 : index
      %c1_15 = arith.constant 1 : index
      %c0_16 = arith.constant 0 : index
      %c0_17 = arith.constant 0 : index
      %15 = vector.load %arg3[%c0_14, %c1_15, %c0_16, %c0_17] : memref<1x9x8x4xf32, #tpu.memory_space<vmem>>, vector<1x1x8x4xf32>
      %16 = vector.shape_cast %15 : vector<1x1x8x4xf32> to vector<8x4xf32>
      %cst_18 = arith.constant dense<0.000000e+00> : vector<8x16xf32>
      %17 = tpu.matmul %16, %14, %cst_18 {dimension_numbers = #tpu.dot_dimension_numbers<[1], [0], [0], [1], [0, 0, 1, 1], [], []>} : vector<8x4xf32>, vector<4x16xf32>, vector<8x16xf32> -> vector<8x16xf32>
      %18 = arith.addf %11, %17 : vector<8x16xf32>
      %c0_19 = arith.constant 0 : index
      %c0_20 = arith.constant 0 : index
      %19 = arith.index_cast %5 : i32 to index
      %c2 = arith.constant 2 : index
      %20 = vector.load %arg2[%c0_19, %c0_20, %19, %c2] : memref<1x4x18x18xf32, #tpu.memory_space<vmem>>, vector<1x4x1x16xf32>
      %21 = vector.shape_cast %20 : vector<1x4x1x16xf32> to vector<4x16xf32>
      %c0_21 = arith.constant 0 : index
      %c2_22 = arith.constant 2 : index
      %c0_23 = arith.constant 0 : index
      %c0_24 = arith.constant 0 : index
      %22 = vector.load %arg3[%c0_21, %c2_22, %c0_23, %c0_24] : memref<1x9x8x4xf32, #tpu.memory_space<vmem>>, vector<1x1x8x4xf32>
      %23 = vector.shape_cast %22 : vector<1x1x8x4xf32> to vector<8x4xf32>
      %cst_25 = arith.constant dense<0.000000e+00> : vector<8x16xf32>
      %24 = tpu.matmul %23, %21, %cst_25 {dimension_numbers = #tpu.dot_dimension_numbers<[1], [0], [0], [1], [0, 0, 1, 1], [], []>} : vector<8x4xf32>, vector<4x16xf32>, vector<8x16xf32> -> vector<8x16xf32>
      %25 = arith.addf %18, %24 : vector<8x16xf32>
      %26 = arith.addi %0, %arg6 : i32
      %c1_i32_26 = arith.constant 1 : i32
      %27 = arith.addi %26, %c1_i32_26 : i32
      %c0_27 = arith.constant 0 : index
      %c0_28 = arith.constant 0 : index
      %28 = arith.index_cast %27 : i32 to index
      %c0_29 = arith.constant 0 : index
      %29 = vector.load %arg2[%c0_27, %c0_28, %28, %c0_29] : memref<1x4x18x18xf32, #tpu.memory_space<vmem>>, vector<1x4x1x16xf32>
      %30 = vector.shape_cast %29 : vector<1x4x1x16xf32> to vector<4x16xf32>
      %c0_30 = arith.constant 0 : index
      %c3 = arith.constant 3 : index
      %c0_31 = arith.constant 0 : index
      %c0_32 = arith.constant 0 : index
      %31 = vector.load %arg3[%c0_30, %c3, %c0_31, %c0_32] : memref<1x9x8x4xf32, #tpu.memory_space<vmem>>, vector<1x1x8x4xf32>
      %32 = vector.shape_cast %31 : vector<1x1x8x4xf32> to vector<8x4xf32>
      %cst_33 = arith.constant dense<0.000000e+00> : vector<8x16xf32>
      %33 = tpu.matmul %32, %30, %cst_33 {dimension_numbers = #tpu.dot_dimension_numbers<[1], [0], [0], [1], [0, 0, 1, 1], [], []>} : vector<8x4xf32>, vector<4x16xf32>, vector<8x16xf32> -> vector<8x16xf32>
      %34 = arith.addf %25, %33 : vector<8x16xf32>
      %c0_34 = arith.constant 0 : index
      %c0_35 = arith.constant 0 : index
      %35 = arith.index_cast %27 : i32 to index
      %c1_36 = arith.constant 1 : index
      %36 = vector.load %arg2[%c0_34, %c0_35, %35, %c1_36] : memref<1x4x18x18xf32, #tpu.memory_space<vmem>>, vector<1x4x1x16xf32>
      %37 = vector.shape_cast %36 : vector<1x4x1x16xf32> to vector<4x16xf32>
      %c0_37 = arith.constant 0 : index
      %c4 = arith.constant 4 : index
      %c0_38 = arith.constant 0 : index
      %c0_39 = arith.constant 0 : index
      %38 = vector.load %arg3[%c0_37, %c4, %c0_38, %c0_39] : memref<1x9x8x4xf32, #tpu.memory_space<vmem>>, vector<1x1x8x4xf32>
      %39 = vector.shape_cast %38 : vector<1x1x8x4xf32> to vector<8x4xf32>
      %cst_40 = arith.constant dense<0.000000e+00> : vector<8x16xf32>
      %40 = tpu.matmul %39, %37, %cst_40 {dimension_numbers = #tpu.dot_dimension_numbers<[1], [0], [0], [1], [0, 0, 1, 1], [], []>} : vector<8x4xf32>, vector<4x16xf32>, vector<8x16xf32> -> vector<8x16xf32>
      %41 = arith.addf %34, %40 : vector<8x16xf32>
      %c0_41 = arith.constant 0 : index
      %c0_42 = arith.constant 0 : index
      %42 = arith.index_cast %27 : i32 to index
      %c2_43 = arith.constant 2 : index
      %43 = vector.load %arg2[%c0_41, %c0_42, %42, %c2_43] : memref<1x4x18x18xf32, #tpu.memory_space<vmem>>, vector<1x4x1x16xf32>
      %44 = vector.shape_cast %43 : vector<1x4x1x16xf32> to vector<4x16xf32>
      %c0_44 = arith.constant 0 : index
      %c5 = arith.constant 5 : index
      %c0_45 = arith.constant 0 : index
      %c0_46 = arith.constant 0 : index
      %45 = vector.load %arg3[%c0_44, %c5, %c0_45, %c0_46] : memref<1x9x8x4xf32, #tpu.memory_space<vmem>>, vector<1x1x8x4xf32>
      %46 = vector.shape_cast %45 : vector<1x1x8x4xf32> to vector<8x4xf32>
      %cst_47 = arith.constant dense<0.000000e+00> : vector<8x16xf32>
      %47 = tpu.matmul %46, %44, %cst_47 {dimension_numbers = #tpu.dot_dimension_numbers<[1], [0], [0], [1], [0, 0, 1, 1], [], []>} : vector<8x4xf32>, vector<4x16xf32>, vector<8x16xf32> -> vector<8x16xf32>
      %48 = arith.addf %41, %47 : vector<8x16xf32>
      %49 = arith.addi %0, %arg6 : i32
      %c2_i32 = arith.constant 2 : i32
      %50 = arith.addi %49, %c2_i32 : i32
      %c0_48 = arith.constant 0 : index
      %c0_49 = arith.constant 0 : index
      %51 = arith.index_cast %50 : i32 to index
      %c0_50 = arith.constant 0 : index
      %52 = vector.load %arg2[%c0_48, %c0_49, %51, %c0_50] : memref<1x4x18x18xf32, #tpu.memory_space<vmem>>, vector<1x4x1x16xf32>
      %53 = vector.shape_cast %52 : vector<1x4x1x16xf32> to vector<4x16xf32>
      %c0_51 = arith.constant 0 : index
      %c6 = arith.constant 6 : index
      %c0_52 = arith.constant 0 : index
      %c0_53 = arith.constant 0 : index
      %54 = vector.load %arg3[%c0_51, %c6, %c0_52, %c0_53] : memref<1x9x8x4xf32, #tpu.memory_space<vmem>>, vector<1x1x8x4xf32>
      %55 = vector.shape_cast %54 : vector<1x1x8x4xf32> to vector<8x4xf32>
      %cst_54 = arith.constant dense<0.000000e+00> : vector<8x16xf32>
      %56 = tpu.matmul %55, %53, %cst_54 {dimension_numbers = #tpu.dot_dimension_numbers<[1], [0], [0], [1], [0, 0, 1, 1], [], []>} : vector<8x4xf32>, vector<4x16xf32>, vector<8x16xf32> -> vector<8x16xf32>
      %57 = arith.addf %48, %56 : vector<8x16xf32>
      %c0_55 = arith.constant 0 : index
      %c0_56 = arith.constant 0 : index
      %58 = arith.index_cast %50 : i32 to index
      %c1_57 = arith.constant 1 : index
      %59 = vector.load %arg2[%c0_55, %c0_56, %58, %c1_57] : memref<1x4x18x18xf32, #tpu.memory_space<vmem>>, vector<1x4x1x16xf32>
      %60 = vector.shape_cast %59 : vector<1x4x1x16xf32> to vector<4x16xf32>
      %c0_58 = arith.constant 0 : index
      %c7 = arith.constant 7 : index
      %c0_59 = arith.constant 0 : index
      %c0_60 = arith.constant 0 : index
      %61 = vector.load %arg3[%c0_58, %c7, %c0_59, %c0_60] : memref<1x9x8x4xf32, #tpu.memory_space<vmem>>, vector<1x1x8x4xf32>
      %62 = vector.shape_cast %61 : vector<1x1x8x4xf32> to vector<8x4xf32>
      %cst_61 = arith.constant dense<0.000000e+00> : vector<8x16xf32>
      %63 = tpu.matmul %62, %60, %cst_61 {dimension_numbers = #tpu.dot_dimension_numbers<[1], [0], [0], [1], [0, 0, 1, 1], [], []>} : vector<8x4xf32>, vector<4x16xf32>, vector<8x16xf32> -> vector<8x16xf32>
      %64 = arith.addf %57, %63 : vector<8x16xf32>
      %c0_62 = arith.constant 0 : index
      %c0_63 = arith.constant 0 : index
      %65 = arith.index_cast %50 : i32 to index
      %c2_64 = arith.constant 2 : index
      %66 = vector.load %arg2[%c0_62, %c0_63, %65, %c2_64] : memref<1x4x18x18xf32, #tpu.memory_space<vmem>>, vector<1x4x1x16xf32>
      %67 = vector.shape_cast %66 : vector<1x4x1x16xf32> to vector<4x16xf32>
      %c0_65 = arith.constant 0 : index
      %c8 = arith.constant 8 : index
      %c0_66 = arith.constant 0 : index
      %c0_67 = arith.constant 0 : index
      %68 = vector.load %arg3[%c0_65, %c8, %c0_66, %c0_67] : memref<1x9x8x4xf32, #tpu.memory_space<vmem>>, vector<1x1x8x4xf32>
      %69 = vector.shape_cast %68 : vector<1x1x8x4xf32> to vector<8x4xf32>
      %cst_68 = arith.constant dense<0.000000e+00> : vector<8x16xf32>
      %70 = tpu.matmul %69, %67, %cst_68 {dimension_numbers = #tpu.dot_dimension_numbers<[1], [0], [0], [1], [0, 0, 1, 1], [], []>} : vector<8x4xf32>, vector<4x16xf32>, vector<8x16xf32> -> vector<8x16xf32>
      %71 = arith.addf %64, %70 : vector<8x16xf32>
      %72 = vector.broadcast %2 : vector<8x1xf32> to vector<8x16xf32>
      %73 = arith.addf %71, %72 : vector<8x16xf32>
      %c0_69 = arith.constant 0 : index
      %c0_70 = arith.constant 0 : index
      %74 = arith.index_cast %arg6 : i32 to index
      %c0_71 = arith.constant 0 : index
      %75 = vector.load %arg5[%c0_69, %c0_70, %74, %c0_71] : memref<1x8x16x16xf32, #tpu.memory_space<vmem>>, vector<1x8x1x16xf32>
      %76 = vector.shape_cast %75 : vector<1x8x1x16xf32> to vector<8x16xf32>
      %77 = vector.shape_cast %73 : vector<8x16xf32> to vector<1x8x1x16xf32>
      tpu.vector_store %arg5[%c0_69, %c0_70, %74, %c0_71], %77 {strides = array<i32>} : memref<1x8x16x16xf32, #tpu.memory_space<vmem>>, vector<1x8x1x16xf32>,
    }
    %c16_i32_3 = arith.constant 16 : i32
    return
  }
  func.func @transform_0(%arg0: i32, %arg1: i32) -> (i32, i32, i32, i32) {
    %c0_i32 = arith.constant 0 : i32
    %c0_i32_0 = arith.constant 0 : i32
    %c0_i32_1 = arith.constant 0 : i32
    %c0_i32_2 = arith.constant 0 : i32
    return %arg0, %c0_i32, %c0_i32_0, %c0_i32_1 : i32, i32, i32, i32
  }
  func.func @transform_1(%arg0: i32, %arg1: i32) -> (i32, i32, i32, i32) {
    %c0_i32 = arith.constant 0 : i32
    %c0_i32_0 = arith.constant 0 : i32
    %c0_i32_1 = arith.constant 0 : i32
    %c0_i32_2 = arith.constant 0 : i32
    return %arg0, %c0_i32, %c0_i32_0, %c0_i32_1 : i32, i32, i32, i32
  }
  func.func @transform_2(%arg0: i32, %arg1: i32) -> (i32, i32, i32) {
    %c0_i32 = arith.constant 0 : i32
    %c0_i32_0 = arith.constant 0 : i32
    %c0_i32_1 = arith.constant 0 : i32
    return %arg0, %c0_i32, %c0_i32_0 : i32, i32, i32
  }
  func.func @transform_3(%arg0: i32, %arg1: i32) -> (i32, i32, i32, i32) {
    %c0_i32 = arith.constant 0 : i32
    %c0_i32_0 = arith.constant 0 : i32
    %c0_i32_1 = arith.constant 0 : i32
    return %arg0, %c0_i32, %arg1, %c0_i32_0 : i32, i32, i32, i32
  }
}

</mosaic_0001>

<llo_original>
// kernel: a_call__.1
$region0: #{a_call__.1}
  #allocation0 [shape = 'u32[]', space=smem, size = 0x4, offset = 0x4, fixed_abs, tag = 'smem constant byte address 0x4 - core index']
  #allocation1 [shape = 'u32[144,128]{1,0:T(1,128)}', space=vmem, size = 0x12000, scoped, tag = 'internal scratch']
  %s0 = inlined_call_operand.hbm [shape: f32[2,4,18,18], index: 0, kind: input, shape index: {}]
  %s1 = inlined_call_operand.hbm [shape: f32[2,9,8,4], index: 1, kind: input, shape index: {}]
  %s2 = inlined_call_operand.hbm [shape: f32[2,8,1], index: 2, kind: input, shape index: {}]
  %s3 = inlined_call_operand.hbm [shape: f32[2,8,16,16], index: 3, kind: output, shape index: {}]
  %s4 = sld [smem:[#allocation0]]
  $region64: #{a_call__.1} parent=0
    _
  %s6 = ssub.s32 1, %s4
  %s7 = scalar_select 0, %s6, %s4
  $region1: #{a_call__.1} parent=0
    #allocation2 [shape = 'u8[98304]{0}', space=vmem, size = 0x18000, scoped, tag = 'input window, operand 0']
    #allocation3 [shape = 's32[2]{0}', space=sflag, size = 0x8, scoped, tag = 'scoped memory for a_call__.1']
    #allocation4 [shape = 's32[2]{0}', space=sflag, size = 0x8, scoped, tag = 'scoped memory for a_call__.1']
    #allocation5 [shape = 'u8[73728]{0}', space=vmem, size = 0x12000, scoped, tag = 'input window, operand 1']
    #allocation6 [shape = 's32[2]{0}', space=sflag, size = 0x8, scoped, tag = 'scoped memory for a_call__.1']
    #allocation7 [shape = 'u8[8192]{0}', space=vmem, size = 0x2000, scoped, tag = 'input window, operand 2']
    #allocation8 [shape = 'u8[131072]{0}', space=vmem, size = 0x20000, scoped, tag = 'output window, operand 0']
    %8 = vsyncpa [#allocation3], 0
    %s9 = scalar_lea.sflag [#allocation3], 1
    %10 = vsyncpa %s9, 0
    %11 = vsyncpa [#allocation6], 0
    %s12 = scalar_lea.sflag [#allocation6], 1
    %13 = vsyncpa %s12, 0
    %14 = vsyncpa [#allocation4], 0
    %s15 = scalar_lea.sflag [#allocation4], 1
    %16 = vsyncpa %s15, 0
    loop: start=0, step=1, limit=4
    $region2: #{a_call__.1} parent=1 // loop_pre_header
      _
    $region3: #{a_call__.1} parent=1 // loop_header
      %s18 = sphi 0, %s22
      %p19 = scmp.ge.s32.totalorder %s18, 4
      %s25 = sphi 0, %s37
      %s26 = sphi 0, %s33
      %s27 = sphi 0, %s25
      %s28 = sphi 0, %s26
      %s29 = sphi 0, %s27
      %s30 = sphi 0, %s28
      %s40 = sphi 0, %s42
      %s43 = sphi 0, %s40
      %s44 = sphi 0, %s43
      %s60 = sphi 0, %s44
      %s66 = sphi 0, %s68
      %s69 = sphi 0, %s66
      %s70 = sphi 0, %s69
      %s86 = sphi 0, %s70
      %s92 = sphi 0, %s94
      %s95 = sphi 0, %s92
      %s96 = sphi 0, %s95
      %s112 = sphi 0, %s96
      %s120 = sphi 0, %s122
      %s123 = sphi 0, %s120
      %s124 = sphi 0, %s123
      %s140 = sphi 0, %s124
    $region4: #{a_call__.1} parent=1 // loop_header_branch
      %21 = sbr.rel (%p19) target = $region8
    $region5: #{a_call__.1} parent=1 // loop_body
      %s23 = ssub.s32 %s18, 1
      %s24 = ssub.s32 %s18, 2
      %s31 = sadd.s32 1, %s26
      %p32 = scmp.ge.s32.totalorder %s31, 1
      %s33 = scalar_select %p32, 0, %s31
      %s34 = sadd.s32 1, %s25
      %s35 = scalar_select %p32, %s34, %s25
      %p36 = scmp.ge.s32.totalorder %s35, 2
      %s37 = scalar_select %p36, 0, %s35
      %s38 = ssub.s32 %s25, %s37
      %p39 = scmp.eq.s32.totalorder %s38, 0
      %s41 = sadd.s32 %s40, 1
      %s42 = scalar_select %p39, %s40, %s41
      %p45 = pneg %p39
      %p46 = scmp.eq.s32.totalorder %s18, 1
      %p47 = por %p45, %p46
      %p48 = scmp.ne.s32.totalorder %s40, %s43
      %p49 = scmp.eq.s32.totalorder %s18, 0
      %p50 = por %p48, %p49
      %p51 = scmp.ne.s32.totalorder %s40, %s43
      %p52 = scmp.eq.s32.totalorder %s23, 1
      %p53 = por %p51, %p52
      %p54 = scmp.ne.s32.totalorder %s43, %s44
      %p55 = scmp.eq.s32.totalorder %s23, 0
      %p56 = por %p54, %p55
      %p57 = scmp.ne.s32.totalorder %s43, %s44
      %p58 = scmp.eq.s32.totalorder %s24, 1
      %p59 = por %p57, %p58
      %p61 = scmp.ne.s32.totalorder %s44, %s60
      %p62 = scmp.eq.s32.totalorder %s24, 0
      %p63 = por %p61, %p62
      %s64 = ssub.s32 %s25, %s37
      %p65 = scmp.eq.s32.totalorder %s64, 0
      %s67 = sadd.s32 %s66, 1
      %s68 = scalar_select %p65, %s66, %s67
      %p71 = pneg %p65
      %p72 = scmp.eq.s32.totalorder %s18, 1
      %p73 = por %p71, %p72
      %p74 = scmp.ne.s32.totalorder %s66, %s69
      %p75 = scmp.eq.s32.totalorder %s18, 0
      %p76 = por %p74, %p75
      %p77 = scmp.ne.s32.totalorder %s66, %s69
      %p78 = scmp.eq.s32.totalorder %s23, 1
      %p79 = por %p77, %p78
      %p80 = scmp.ne.s32.totalorder %s69, %s70
      %p81 = scmp.eq.s32.totalorder %s23, 0
      %p82 = por %p80, %p81
      %p83 = scmp.ne.s32.totalorder %s69, %s70
      %p84 = scmp.eq.s32.totalorder %s24, 1
      %p85 = por %p83, %p84
      %p87 = scmp.ne.s32.totalorder %s70, %s86
      %p88 = scmp.eq.s32.totalorder %s24, 0
      %p89 = por %p87, %p88
      %s90 = ssub.s32 %s25, %s37
      %p91 = scmp.eq.s32.totalorder %s90, 0
      %s93 = sadd.s32 %s92, 1
      %s94 = scalar_select %p91, %s92, %s93
      %p97 = pneg %p91
      %p98 = scmp.eq.s32.totalorder %s18, 1
      %p99 = por %p97, %p98
      %p100 = scmp.ne.s32.totalorder %s92, %s95
      %p101 = scmp.eq.s32.totalorder %s18, 0
      %p102 = por %p100, %p101
      %p103 = scmp.ne.s32.totalorder %s92, %s95
      %p104 = scmp.eq.s32.totalorder %s23, 1
      %p105 = por %p103, %p104
      %p106 = scmp.ne.s32.totalorder %s95, %s96
      %p107 = scmp.eq.s32.totalorder %s23, 0
      %p108 = por %p106, %p107
      %p109 = scmp.ne.s32.totalorder %s95, %s96
      %p110 = scmp.eq.s32.totalorder %s24, 1
      %p111 = por %p109, %p110
      %p113 = scmp.ne.s32.totalorder %s96, %s112
      %p114 = scmp.eq.s32.totalorder %s24, 0
      %p115 = por %p113, %p114
      %s116 = ssub.s32 %s25, %s37
      %s117 = ssub.s32 %s26, %s33
      %s118 = sor.u32 %s116, %s117
      %p119 = scmp.eq.s32.totalorder %s118, 0
      %s121 = sadd.s32 %s120, 1
      %s122 = scalar_select %p119, %s120, %s121
      %p125 = pneg %p119
      %p126 = scmp.eq.s32.totalorder %s18, 1
      %p127 = por %p125, %p126
      %p128 = scmp.ne.s32.totalorder %s120, %s123
      %p129 = scmp.eq.s32.totalorder %s18, 0
      %p130 = por %p128, %p129
      %p131 = scmp.ne.s32.totalorder %s120, %s123
      %p132 = scmp.eq.s32.totalorder %s23, 1
      %p133 = por %p131, %p132
      %p134 = scmp.ne.s32.totalorder %s123, %s124
      %p135 = scmp.eq.s32.totalorder %s23, 0
      %p136 = por %p134, %p135
      %p137 = scmp.ne.s32.totalorder %s123, %s124
      %p138 = scmp.eq.s32.totalorder %s24, 1
      %p139 = por %p137, %p138
      %p141 = scmp.ne.s32.totalorder %s124, %s140
      %p142 = scmp.eq.s32.totalorder %s24, 0
      %p143 = por %p141, %p142
      %p144 = scmp.le.s32.totalorder 1, %s18
      %p145 = scmp.lt.s32.totalorder %s18, 3
      %p146 = pnand %p144, %p145
      %p147 = pneg %p146
      // Predicated region
      $region9: #{a_call__.1} parent=5 // pred_check
        _
      $region10: #{a_call__.1} parent=5 // pred_check_branch
        %149 = sbr.rel (%p146) target = $region12
      $region11: #{a_call__.1} parent=5 // pred_region
        %s150 = ssub.s32 %s18, 1
      $region12: #{a_call__.1} parent=5 // pred_fallthru
        _
      %p151 = scmp.lt.s32.totalorder %s18, 2
      // Predicated region
      $region13: #{a_call__.1} parent=5 // pred_check
        %p152 = pneg %p151
      $region14: #{a_call__.1} parent=5 // pred_check_branch
        %154 = sbr.rel (%p152) target = $region16
      $region15: #{a_call__.1} parent=5 // pred_region
        // Predicated region
        $region17: #{a_call__.1} parent=15 // pred_check
          %p155 = pneg %p50
        $region18: #{a_call__.1} parent=15 // pred_check_branch
          %157 = sbr.rel (%p155) target = $region20
        $region19: #{a_call__.1} parent=15 // pred_region
          %s158 = sand.u32 %s40, 1
          %s159 = scalar_lea.sflag [#allocation3], %s158
          %s160 = sand.u32 %s40, 1
          %s161 = smul.addr %s160, 96
          %s162 = scalar_lea.vmem [#allocation2], %s161
          %s164 = ssub.s32 1536, 1536
          %165 = vsyncadd %s159, %s164
          %s166 = smul.addr %s25, 12
          %s167 = smul.addr %s166, 128
          %s168 = scalar_lea.hbm %s0, %s167
          %s169 = sshll.u32 %s162, 4
          %s170 = int_to_ptr.vmem [resolvable:$true] %s169
          %175 = dma.hbm_to_vmem [thread:$0]  %s168, 1536, %s170, %s159, 128, 128, 8
        $region20: #{a_call__.1} parent=15 // pred_fallthru
          _
        // Predicated region
        $region21: #{a_call__.1} parent=15 // pred_check
          %p176 = pneg %p76
        $region22: #{a_call__.1} parent=15 // pred_check_branch
          %178 = sbr.rel (%p176) target = $region24
        $region23: #{a_call__.1} parent=15 // pred_region
          %s179 = sand.u32 %s18, 1
          %s180 = scalar_lea.sflag [#allocation6], %s179
          %s181 = sand.u32 %s66, 1
          %s182 = smul.addr %s181, 72
          %s183 = scalar_lea.vmem [#allocation5], %s182
          %s185 = ssub.s32 1152, 1152
          %186 = vsyncadd %s180, %s185
          %s187 = smul.addr %s25, 9
          %s188 = smul.addr %s187, 128
          %s189 = scalar_lea.hbm %s1, %s188
          %s190 = sshll.u32 %s183, 4
          %s191 = int_to_ptr.vmem [resolvable:$true] %s190
          %196 = dma.hbm_to_vmem [thread:$0]  %s189, 1152, %s191, %s180, 128, 128, 8
        $region24: #{a_call__.1} parent=15 // pred_fallthru
          _
        // Predicated region
        $region25: #{a_call__.1} parent=15 // pred_check
          %p197 = pneg %p102
        $region26: #{a_call__.1} parent=15 // pred_check_branch
          %199 = sbr.rel (%p197) target = $region28
        $region27: #{a_call__.1} parent=15 // pred_region
          %s200 = sand.u32 %s18, 1
          %s201 = scalar_lea.sflag [#allocation6], %s200
          %s202 = sand.u32 %s92, 1
          %s203 = smul.addr %s202, 8
          %s204 = scalar_lea.vmem [#allocation7], %s203
          %s206 = ssub.s32 128, 128
          %207 = vsyncadd %s201, %s206
          %s208 = smul.addr %s25, 128
          %s209 = scalar_lea.hbm %s2, %s208
          %s211 = sshll.u32 %s204, 4
          %s212 = int_to_ptr.vmem [resolvable:$true] %s211
          %214 = dma.hbm_to_vmem [thread:$0]  %s209, 128, %s212, %s201
        $region28: #{a_call__.1} parent=15 // pred_fallthru
          _
      $region16: #{a_call__.1} parent=5 // pred_fallthru
        _
      %p215 = scmp.le.s32.totalorder 1, %s18
      %p216 = scmp.lt.s32.totalorder %s18, 3
      %p217 = pnand %p215, %p216
      %p218 = pneg %p217
      // Predicated region
      $region29: #{a_call__.1} parent=5 // pred_check
        _
      $region30: #{a_call__.1} parent=5 // pred_check_branch
        %220 = sbr.rel (%p217) target = $region32
      $region31: #{a_call__.1} parent=5 // pred_region
        %s221 = ssub.s32 %s18, 1
        %s222 = sand.u32 %s43, 1
        %s223 = scalar_lea.sflag [#allocation3], %s222
        %s224 = sand.u32 %s43, 1
        %s225 = smul.addr %s224, 96
        %s226 = scalar_lea.vmem [#allocation2], %s225
        // Predicated region
        $region33: #{a_call__.1} parent=31 // pred_check
          %p227 = pneg %p56
        $region34: #{a_call__.1} parent=31 // pred_check_branch
          %229 = sbr.rel (%p227) target = $region36
        $region35: #{a_call__.1} parent=31 // pred_region
          %230 = dma.done %s223, 1536
        $region36: #{a_call__.1} parent=31 // pred_fallthru
          _
        %s231 = sand.u32 %s23, 1
        %s232 = scalar_lea.sflag [#allocation6], %s231
        %s233 = sand.u32 %s69, 1
        %s234 = smul.addr %s233, 72
        %s235 = scalar_lea.vmem [#allocation5], %s234
        // Predicated region
        $region37: #{a_call__.1} parent=31 // pred_check
          %p236 = pneg %p82
        $region38: #{a_call__.1} parent=31 // pred_check_branch
          %238 = sbr.rel (%p236) target = $region40
        $region39: #{a_call__.1} parent=31 // pred_region
          %239 = dma.done %s232, 1152
        $region40: #{a_call__.1} parent=31 // pred_fallthru
          _
        %s240 = sand.u32 %s23, 1
        %s241 = scalar_lea.sflag [#allocation6], %s240
        %s242 = sand.u32 %s95, 1
        %s243 = smul.addr %s242, 8
        %s244 = scalar_lea.vmem [#allocation7], %s243
        // Predicated region
        $region41: #{a_call__.1} parent=31 // pred_check
          %p245 = pneg %p108
        $region42: #{a_call__.1} parent=31 // pred_check_branch
          %247 = sbr.rel (%p245) target = $region44
        $region43: #{a_call__.1} parent=31 // pred_region
          %248 = dma.done %s241, 128
        $region44: #{a_call__.1} parent=31 // pred_fallthru
          _
        %s249 = sand.u32 %s43, 1
        %s250 = scalar_lea.sflag [#allocation3], %s249
        %s251 = sand.u32 %s43, 1
        %s252 = smul.addr %s251, 96
        %s253 = scalar_lea.vmem [#allocation2], %s252
        %p254 = pneg %p56
        %p255 = pneg %p53
        %s256 = sand.u32 %s23, 1
        %s257 = scalar_lea.sflag [#allocation6], %s256
        %s258 = sand.u32 %s69, 1
        %s259 = smul.addr %s258, 72
        %s260 = scalar_lea.vmem [#allocation5], %s259
        %p261 = pneg %p82
        %p262 = pneg %p79
        %s263 = sand.u32 %s23, 1
        %s264 = scalar_lea.sflag [#allocation6], %s263
        %s265 = sand.u32 %s95, 1
        %s266 = smul.addr %s265, 8
        %s267 = scalar_lea.vmem [#allocation7], %s266
        %p268 = pneg %p108
        %p269 = pneg %p105
        %p270 = pneg %p136
        %p271 = pneg %p133
        %s272 = sand.u32 %s123, 1
        %s273 = scalar_lea.sflag [#allocation4], %s272
        %s274 = sand.u32 %s123, 1
        %s275 = smul.addr %s274, 128
        %s276 = scalar_lea.vmem [#allocation8], %s275
        %s277 = smul.u32 2, %s28
        %s278 = smul.u32 %s28, 16
        %v279 = vld [vmem:[%s244] sm:$0xff]
        loop: start=0, step=1, limit=16
        $region45: #{a_call__.1} parent=31 // loop_pre_header
          _
        $region46: #{a_call__.1} parent=31 // loop_header
          %s281 = sphi 0, %s285
          %p282 = scmp.ge.s32.totalorder %s281, 16
        $region47: #{a_call__.1} parent=31 // loop_header_branch
          %284 = sbr.rel (%p282) target = $region51
        $region48: #{a_call__.1} parent=31 // loop_body
          %s286 = sadd.s32 %s278, %s281
          %s287 = scalar_lea.vmem %s226, %s286 [#allocation2]
          %v288 = vld [vmem:[%s287] sm:$0x1]
          %v289 = vld [vmem:[%s287 + $0x18] sm:$0x1]
          %v290 = vld [vmem:[%s287 + $0x30] sm:$0x1]
          %v291 = vld [vmem:[%s287 + $0x48] sm:$0x1]
          %v292 = vld [vmem:[%s235] sm:$0xff]
          %s293 = scalar_lea.vmem %s235, 8 [#allocation5]
          %v294 = vld [vmem:[%s293] sm:$0xff]
          %v299 = vrot.slane %v289, 7
          %vm300 = vcmask 1041409
          %v301 = vsel %vm300, %v299, %v288
          %v302 = vrot.slane %v290, 6
          %vm303 = vcmask 1042434
          %v304 = vsel %vm303, %v302, %v301
          %v305 = vrot.slane %v291, 5
          %vm306 = vcmask 1043459
          %v307 = vsel %vm306, %v305, %v304
          %308 = vrot.lane.b32.xlu0 %v307, 127
          %v309 = vpop.permute.xlu0 %308
          %vm310 = vcmask 31744
          %v312 = vsel %vm310, %v294, 0
          %vm314 = vcmask 1043456
          %v315 = vsel %vm314, %v309, 0
          %317 = vmatprep.subr.mxu0 0.0
          %318 = vmatpush1.msra.mxu0 %v315
          %319 = vmatprep.subr.mxu0 0.0
          %320 = vmatpush1.msra.mxu0 0.0
          %321 = vmatprep.subr.mxu0 0.0
          %322 = vmatpush1.msra.mxu0 0.0
          %323 = vmatprep.subr.mxu0 0.0
          %324 = vmatpush1.msra.mxu0 0.0
          %325 = vmatprep.subr.mxu0 0.0
          %326 = vmatpush1.msra.mxu0 0.0
          %327 = vmatprep.subr.mxu0 0.0
          %328 = vmatpush1.msra.mxu0 0.0
          %329 = vmatprep.subr.mxu0 0.0
          %330 = vmatpush1.msra.mxu0 0.0
          %331 = vmatprep.subr.mxu0 0.0
          %332 = vmatpush1.msra.mxu0 0.0
          %333 = vmatprep.subr.mxu0 0.0
          %334 = vmatpush1.msra.mxu0 0.0
          %335 = vmatprep.subr.mxu0 0.0
          %336 = vmatpush1.msra.mxu0 0.0
          %337 = vmatprep.subr.mxu0 0.0
          %338 = vmatpush1.msra.mxu0 0.0
          %339 = vmatprep.subr.mxu0 0.0
          %340 = vmatpush1.msra.mxu0 0.0
          %341 = vmatprep.subr.mxu0 0.0
          %342 = vmatpush1.msra.mxu0 0.0
          %343 = vmatprep.subr.mxu0 0.0
          %344 = vmatpush1.msra.mxu0 0.0
          %345 = vmatprep.subr.mxu0 0.0
          %346 = vmatpush1.msra.mxu0 0.0
          %347 = vmatprep.subr.mxu0 0.0
          %348 = vmatpush1.msra.mxu0 0.0
          %349 = vmatprep.subr.mxu0 0.0
          %350 = vmatpush1.msra.mxu0 0.0
          %351 = vmatprep.subr.mxu0 0.0
          %352 = vmatpush1.msra.mxu0 0.0
          %353 = vmatprep.subr.mxu0 0.0
          %354 = vmatpush1.msra.mxu0 0.0
          %355 = vmatprep.subr.mxu0 0.0
          %356 = vmatpush1.msra.mxu0 0.0
          %357 = vmatprep.subr.mxu0 0.0
          %358 = vmatpush1.msra.mxu0 0.0
          %359 = vmatprep.subr.mxu0 0.0
          %360 = vmatpush1.msra.mxu0 0.0
          %361 = vmatprep.subr.mxu0 0.0
          %362 = vmatpush1.msra.mxu0 0.0
          %363 = vmatprep.subr.mxu0 0.0
          %364 = vmatpush1.msra.mxu0 0.0
          %365 = vmatprep.subr.mxu0 0.0
          %366 = vmatpush1.msra.mxu0 0.0
          %367 = vmatprep.subr.mxu0 0.0
          %368 = vmatpush1.msra.mxu0 0.0
          %369 = vmatprep.subr.mxu0 0.0
          %370 = vmatpush1.msra.mxu0 0.0
          %371 = vmatprep.subr.mxu0 0.0
          %372 = vmatpush1.msra.mxu0 0.0
          %373 = vmatprep.subr.mxu0 0.0
          %374 = vmatpush1.msra.mxu0 0.0
          %375 = vmatprep.subr.mxu0 0.0
          %376 = vmatpush1.msra.mxu0 0.0
          %377 = vmatprep.subr.mxu0 0.0
          %378 = vmatpush1.msra.mxu0 0.0
          %379 = vmatprep.subr.mxu0 0.0
          %380 = vmatpush1.msra.mxu0 0.0
          %381 = vmatprep.mubr.f32.mxu0 0.0
          %382 = vmatmul.mubr.f32.gmra.mrb[0].mxu0 %v312
          %v383 = vpop.f32.mrb[0].mxu0
          %v384 = vadd.f32 0.0, %v383
          %v385 = vpop.f32.mrb[0].mxu0
          %386 = vdwg.mxu0
          %v388 = vsel %vm310, %v292, 0
          %v390 = vsel %vm314, %v307, 0
          %392 = vmatprep.subr.mxu0 0.0
          %393 = vmatpush1.msra.mxu0 %v390
          %394 = vmatprep.subr.mxu0 0.0
          %395 = vmatpush1.msra.mxu0 0.0
          %396 = vmatprep.subr.mxu0 0.0
          %397 = vmatpush1.msra.mxu0 0.0
          %398 = vmatprep.subr.mxu0 0.0
          %399 = vmatpush1.msra.mxu0 0.0
          %400 = vmatprep.subr.mxu0 0.0
          %401 = vmatpush1.msra.mxu0 0.0
          %402 = vmatprep.subr.mxu0 0.0
          %403 = vmatpush1.msra.mxu0 0.0
          %404 = vmatprep.subr.mxu0 0.0
          %405 = vmatpush1.msra.mxu0 0.0
          %406 = vmatprep.subr.mxu0 0.0
          %407 = vmatpush1.msra.mxu0 0.0
          %408 = vmatprep.subr.mxu0 0.0
          %409 = vmatpush1.msra.mxu0 0.0
          %410 = vmatprep.subr.mxu0 0.0
          %411 = vmatpush1.msra.mxu0 0.0
          %412 = vmatprep.subr.mxu0 0.0
          %413 = vmatpush1.msra.mxu0 0.0
          %414 = vmatprep.subr.mxu0 0.0
          %415 = vmatpush1.msra.mxu0 0.0
          %416 = vmatprep.subr.mxu0 0.0
          %417 = vmatpush1.msra.mxu0 0.0
          %418 = vmatprep.subr.mxu0 0.0
          %419 = vmatpush1.msra.mxu0 0.0
          %420 = vmatprep.subr.mxu0 0.0
          %421 = vmatpush1.msra.mxu0 0.0
          %422 = vmatprep.subr.mxu0 0.0
          %423 = vmatpush1.msra.mxu0 0.0
          %424 = vmatprep.subr.mxu0 0.0
          %425 = vmatpush1.msra.mxu0 0.0
          %426 = vmatprep.subr.mxu0 0.0
          %427 = vmatpush1.msra.mxu0 0.0
          %428 = vmatprep.subr.mxu0 0.0
          %429 = vmatpush1.msra.mxu0 0.0
          %430 = vmatprep.subr.mxu0 0.0
          %431 = vmatpush1.msra.mxu0 0.0
          %432 = vmatprep.subr.mxu0 0.0
          %433 = vmatpush1.msra.mxu0 0.0
          %434 = vmatprep.subr.mxu0 0.0
          %435 = vmatpush1.msra.mxu0 0.0
          %436 = vmatprep.subr.mxu0 0.0
          %437 = vmatpush1.msra.mxu0 0.0
          %438 = vmatprep.subr.mxu0 0.0
          %439 = vmatpush1.msra.mxu0 0.0
          %440 = vmatprep.subr.mxu0 0.0
          %441 = vmatpush1.msra.mxu0 0.0
          %442 = vmatprep.subr.mxu0 0.0
          %443 = vmatpush1.msra.mxu0 0.0
          %444 = vmatprep.subr.mxu0 0.0
          %445 = vmatpush1.msra.mxu0 0.0
          %446 = vmatprep.subr.mxu0 0.0
          %447 = vmatpush1.msra.mxu0 0.0
          %448 = vmatprep.subr.mxu0 0.0
          %449 = vmatpush1.msra.mxu0 0.0
          %450 = vmatprep.subr.mxu0 0.0
          %451 = vmatpush1.msra.mxu0 0.0
          %452 = vmatprep.subr.mxu0 0.0
          %453 = vmatpush1.msra.mxu0 0.0
          %454 = vmatprep.subr.mxu0 0.0
          %455 = vmatpush1.msra.mxu0 0.0
          %456 = vmatprep.mubr.f32.mxu0 0.0
          %457 = vmatmul.mubr.f32.gmra.mrb[0].mxu0 %v388
          %v458 = vpop.f32.mrb[0].mxu0
          %v459 = vadd.f32 %v384, %v458
          %v460 = vpop.f32.mrb[0].mxu0
          %461 = vdwg.mxu0
          %s462 = scalar_lea.vmem %s235, 16 [#allocation5]
          %v463 = vld [vmem:[%s462] sm:$0xff]
          %464 = vrot.lane.b32.xlu0 %v307, 126
          %v465 = vpop.permute.xlu0 %464
          %v467 = vsel %vm310, %v463, 0
          %v469 = vsel %vm314, %v465, 0
          %471 = vmatprep.subr.mxu0 0.0
          %472 = vmatpush1.msra.mxu0 %v469
          %473 = vmatprep.subr.mxu0 0.0
          %474 = vmatpush1.msra.mxu0 0.0
          %475 = vmatprep.subr.mxu0 0.0
          %476 = vmatpush1.msra.mxu0 0.0
          %477 = vmatprep.subr.mxu0 0.0
          %478 = vmatpush1.msra.mxu0 0.0
          %479 = vmatprep.subr.mxu0 0.0
          %480 = vmatpush1.msra.mxu0 0.0
          %481 = vmatprep.subr.mxu0 0.0
          %482 = vmatpush1.msra.mxu0 0.0
          %483 = vmatprep.subr.mxu0 0.0
          %484 = vmatpush1.msra.mxu0 0.0
          %485 = vmatprep.subr.mxu0 0.0
          %486 = vmatpush1.msra.mxu0 0.0
          %487 = vmatprep.subr.mxu0 0.0
          %488 = vmatpush1.msra.mxu0 0.0
          %489 = vmatprep.subr.mxu0 0.0
          %490 = vmatpush1.msra.mxu0 0.0
          %491 = vmatprep.subr.mxu0 0.0
          %492 = vmatpush1.msra.mxu0 0.0
          %493 = vmatprep.subr.mxu0 0.0
          %494 = vmatpush1.msra.mxu0 0.0
          %495 = vmatprep.subr.mxu0 0.0
          %496 = vmatpush1.msra.mxu0 0.0
          %497 = vmatprep.subr.mxu0 0.0
          %498 = vmatpush1.msra.mxu0 0.0
          %499 = vmatprep.subr.mxu0 0.0
          %500 = vmatpush1.msra.mxu0 0.0
          %501 = vmatprep.subr.mxu0 0.0
          %502 = vmatpush1.msra.mxu0 0.0
          %503 = vmatprep.subr.mxu0 0.0
          %504 = vmatpush1.msra.mxu0 0.0
          %505 = vmatprep.subr.mxu0 0.0
          %506 = vmatpush1.msra.mxu0 0.0
          %507 = vmatprep.subr.mxu0 0.0
          %508 = vmatpush1.msra.mxu0 0.0
          %509 = vmatprep.subr.mxu0 0.0
          %510 = vmatpush1.msra.mxu0 0.0
          %511 = vmatprep.subr.mxu0 0.0
          %512 = vmatpush1.msra.mxu0 0.0
          %513 = vmatprep.subr.mxu0 0.0
          %514 = vmatpush1.msra.mxu0 0.0
          %515 = vmatprep.subr.mxu0 0.0
          %516 = vmatpush1.msra.mxu0 0.0
          %517 = vmatprep.subr.mxu0 0.0
          %518 = vmatpush1.msra.mxu0 0.0
          %519 = vmatprep.subr.mxu0 0.0
          %520 = vmatpush1.msra.mxu0 0.0
          %521 = vmatprep.subr.mxu0 0.0
          %522 = vmatpush1.msra.mxu0 0.0
          %523 = vmatprep.subr.mxu0 0.0
          %524 = vmatpush1.msra.mxu0 0.0
          %525 = vmatprep.subr.mxu0 0.0
          %526 = vmatpush1.msra.mxu0 0.0
          %527 = vmatprep.subr.mxu0 0.0
          %528 = vmatpush1.msra.mxu0 0.0
          %529 = vmatprep.subr.mxu0 0.0
          %530 = vmatpush1.msra.mxu0 0.0
          %531 = vmatprep.subr.mxu0 0.0
          %532 = vmatpush1.msra.mxu0 0.0
          %533 = vmatprep.subr.mxu0 0.0
          %534 = vmatpush1.msra.mxu0 0.0
          %535 = vmatprep.mubr.f32.mxu0 0.0
          %536 = vmatmul.mubr.f32.gmra.mrb[0].mxu0 %v467
          %v537 = vpop.f32.mrb[0].mxu0
          %v538 = vadd.f32 0.0, %v537
          %v539 = vpop.f32.mrb[0].mxu0
          %540 = vdwg.mxu0
          %v541 = vadd.f32 %v459, %v538
          %s542 = sadd.s32 %s286, 1
          %s543 = scalar_lea.vmem %s226, %s542 [#allocation2]
          %v544 = vld [vmem:[%s543] sm:$0x1]
          %v545 = vld [vmem:[%s543 + $0x18] sm:$0x1]
          %v546 = vld [vmem:[%s543 + $0x30] sm:$0x1]
          %v547 = vld [vmem:[%s543 + $0x48] sm:$0x1]
          %s548 = scalar_lea.vmem %s235, 24 [#allocation5]
          %v549 = vld [vmem:[%s548] sm:$0xff]
          %v554 = vrot.slane %v545, 7
          %v555 = vsel %vm300, %v554, %v544
          %v556 = vrot.slane %v546, 6
          %v557 = vsel %vm303, %v556, %v555
          %v558 = vrot.slane %v547, 5
          %v559 = vsel %vm306, %v558, %v557
          %v561 = vsel %vm310, %v549, 0
          %v563 = vsel %vm314, %v559, 0
          %565 = vmatprep.subr.mxu0 0.0
          %566 = vmatpush1.msra.mxu0 %v563
          %567 = vmatprep.subr.mxu0 0.0
          %568 = vmatpush1.msra.mxu0 0.0
          %569 = vmatprep.subr.mxu0 0.0
          %570 = vmatpush1.msra.mxu0 0.0
          %571 = vmatprep.subr.mxu0 0.0
          %572 = vmatpush1.msra.mxu0 0.0
          %573 = vmatprep.subr.mxu0 0.0
          %574 = vmatpush1.msra.mxu0 0.0
          %575 = vmatprep.subr.mxu0 0.0
          %576 = vmatpush1.msra.mxu0 0.0
          %577 = vmatprep.subr.mxu0 0.0
          %578 = vmatpush1.msra.mxu0 0.0
          %579 = vmatprep.subr.mxu0 0.0
          %580 = vmatpush1.msra.mxu0 0.0
          %581 = vmatprep.subr.mxu0 0.0
          %582 = vmatpush1.msra.mxu0 0.0
          %583 = vmatprep.subr.mxu0 0.0
          %584 = vmatpush1.msra.mxu0 0.0
          %585 = vmatprep.subr.mxu0 0.0
          %586 = vmatpush1.msra.mxu0 0.0
          %587 = vmatprep.subr.mxu0 0.0
          %588 = vmatpush1.msra.mxu0 0.0
          %589 = vmatprep.subr.mxu0 0.0
          %590 = vmatpush1.msra.mxu0 0.0
          %591 = vmatprep.subr.mxu0 0.0
          %592 = vmatpush1.msra.mxu0 0.0
          %593 = vmatprep.subr.mxu0 0.0
          %594 = vmatpush1.msra.mxu0 0.0
          %595 = vmatprep.subr.mxu0 0.0
          %596 = vmatpush1.msra.mxu0 0.0
          %597 = vmatprep.subr.mxu0 0.0
          %598 = vmatpush1.msra.mxu0 0.0
          %599 = vmatprep.subr.mxu0 0.0
          %600 = vmatpush1.msra.mxu0 0.0
          %601 = vmatprep.subr.mxu0 0.0
          %602 = vmatpush1.msra.mxu0 0.0
          %603 = vmatprep.subr.mxu0 0.0
          %604 = vmatpush1.msra.mxu0 0.0
          %605 = vmatprep.subr.mxu0 0.0
          %606 = vmatpush1.msra.mxu0 0.0
          %607 = vmatprep.subr.mxu0 0.0
          %608 = vmatpush1.msra.mxu0 0.0
          %609 = vmatprep.subr.mxu0 0.0
          %610 = vmatpush1.msra.mxu0 0.0
          %611 = vmatprep.subr.mxu0 0.0
          %612 = vmatpush1.msra.mxu0 0.0
          %613 = vmatprep.subr.mxu0 0.0
          %614 = vmatpush1.msra.mxu0 0.0
          %615 = vmatprep.subr.mxu0 0.0
          %616 = vmatpush1.msra.mxu0 0.0
          %617 = vmatprep.subr.mxu0 0.0
          %618 = vmatpush1.msra.mxu0 0.0
          %619 = vmatprep.subr.mxu0 0.0
          %620 = vmatpush1.msra.mxu0 0.0
          %621 = vmatprep.subr.mxu0 0.0
          %622 = vmatpush1.msra.mxu0 0.0
          %623 = vmatprep.subr.mxu0 0.0
          %624 = vmatpush1.msra.mxu0 0.0
          %625 = vmatprep.subr.mxu0 0.0
          %626 = vmatpush1.msra.mxu0 0.0
          %627 = vmatprep.subr.mxu0 0.0
          %628 = vmatpush1.msra.mxu0 0.0
          %629 = vmatprep.mubr.f32.mxu0 0.0
          %630 = vmatmul.mubr.f32.gmra.mrb[0].mxu0 %v561
          %v631 = vpop.f32.mrb[0].mxu0
          %v632 = vadd.f32 0.0, %v631
          %v633 = vpop.f32.mrb[0].mxu0
          %634 = vdwg.mxu0
          %v635 = vadd.f32 %v541, %v632
          %s636 = scalar_lea.vmem %s235, 32 [#allocation5]
          %v637 = vld [vmem:[%s636] sm:$0xff]
          %638 = vrot.lane.b32.xlu0 %v559, 127
          %v639 = vpop.permute.xlu0 %638
          %v641 = vsel %vm310, %v637, 0
          %v643 = vsel %vm314, %v639, 0
          %645 = vmatprep.subr.mxu0 0.0
          %646 = vmatpush1.msra.mxu0 %v643
          %647 = vmatprep.subr.mxu0 0.0
          %648 = vmatpush1.msra.mxu0 0.0
          %649 = vmatprep.subr.mxu0 0.0
          %650 = vmatpush1.msra.mxu0 0.0
          %651 = vmatprep.subr.mxu0 0.0
          %652 = vmatpush1.msra.mxu0 0.0
          %653 = vmatprep.subr.mxu0 0.0
          %654 = vmatpush1.msra.mxu0 0.0
          %655 = vmatprep.subr.mxu0 0.0
          %656 = vmatpush1.msra.mxu0 0.0
          %657 = vmatprep.subr.mxu0 0.0
          %658 = vmatpush1.msra.mxu0 0.0
          %659 = vmatprep.subr.mxu0 0.0
          %660 = vmatpush1.msra.mxu0 0.0
          %661 = vmatprep.subr.mxu0 0.0
          %662 = vmatpush1.msra.mxu0 0.0
          %663 = vmatprep.subr.mxu0 0.0
          %664 = vmatpush1.msra.mxu0 0.0
          %665 = vmatprep.subr.mxu0 0.0
          %666 = vmatpush1.msra.mxu0 0.0
          %667 = vmatprep.subr.mxu0 0.0
          %668 = vmatpush1.msra.mxu0 0.0
          %669 = vmatprep.subr.mxu0 0.0
          %670 = vmatpush1.msra.mxu0 0.0
          %671 = vmatprep.subr.mxu0 0.0
          %672 = vmatpush1.msra.mxu0 0.0
          %673 = vmatprep.subr.mxu0 0.0
          %674 = vmatpush1.msra.mxu0 0.0
          %675 = vmatprep.subr.mxu0 0.0
          %676 = vmatpush1.msra.mxu0 0.0
          %677 = vmatprep.subr.mxu0 0.0
          %678 = vmatpush1.msra.mxu0 0.0
          %679 = vmatprep.subr.mxu0 0.0
          %680 = vmatpush1.msra.mxu0 0.0
          %681 = vmatprep.subr.mxu0 0.0
          %682 = vmatpush1.msra.mxu0 0.0
          %683 = vmatprep.subr.mxu0 0.0
          %684 = vmatpush1.msra.mxu0 0.0
          %685 = vmatprep.subr.mxu0 0.0
          %686 = vmatpush1.msra.mxu0 0.0
          %687 = vmatprep.subr.mxu0 0.0
          %688 = vmatpush1.msra.mxu0 0.0
          %689 = vmatprep.subr.mxu0 0.0
          %690 = vmatpush1.msra.mxu0 0.0
          %691 = vmatprep.subr.mxu0 0.0
          %692 = vmatpush1.msra.mxu0 0.0
          %693 = vmatprep.subr.mxu0 0.0
          %694 = vmatpush1.msra.mxu0 0.0
          %695 = vmatprep.subr.mxu0 0.0
          %696 = vmatpush1.msra.mxu0 0.0
          %697 = vmatprep.subr.mxu0 0.0
          %698 = vmatpush1.msra.mxu0 0.0
          %699 = vmatprep.subr.mxu0 0.0
          %700 = vmatpush1.msra.mxu0 0.0
          %701 = vmatprep.subr.mxu0 0.0
          %702 = vmatpush1.msra.mxu0 0.0
          %703 = vmatprep.subr.mxu0 0.0
          %704 = vmatpush1.msra.mxu0 0.0
          %705 = vmatprep.subr.mxu0 0.0
          %706 = vmatpush1.msra.mxu0 0.0
          %707 = vmatprep.subr.mxu0 0.0
          %708 = vmatpush1.msra.mxu0 0.0
          %709 = vmatprep.mubr.f32.mxu0 0.0
          %710 = vmatmul.mubr.f32.gmra.mrb[0].mxu0 %v641
          %v711 = vpop.f32.mrb[0].mxu0
          %v712 = vadd.f32 0.0, %v711
          %v713 = vpop.f32.mrb[0].mxu0
          %714 = vdwg.mxu0
          %v715 = vadd.f32 %v635, %v712
          %s716 = scalar_lea.vmem %s235, 40 [#allocation5]
          %v717 = vld [vmem:[%s716] sm:$0xff]
          %718 = vrot.lane.b32.xlu0 %v559, 126
          %v719 = vpop.permute.xlu0 %718
          %v721 = vsel %vm310, %v717, 0
          %v723 = vsel %vm314, %v719, 0
          %725 = vmatprep.subr.mxu0 0.0
          %726 = vmatpush1.msra.mxu0 %v723
          %727 = vmatprep.subr.mxu0 0.0
          %728 = vmatpush1.msra.mxu0 0.0
          %729 = vmatprep.subr.mxu0 0.0
          %730 = vmatpush1.msra.mxu0 0.0
          %731 = vmatprep.subr.mxu0 0.0
          %732 = vmatpush1.msra.mxu0 0.0
          %733 = vmatprep.subr.mxu0 0.0
          %734 = vmatpush1.msra.mxu0 0.0
          %735 = vmatprep.subr.mxu0 0.0
          %736 = vmatpush1.msra.mxu0 0.0
          %737 = vmatprep.subr.mxu0 0.0
          %738 = vmatpush1.msra.mxu0 0.0
          %739 = vmatprep.subr.mxu0 0.0
          %740 = vmatpush1.msra.mxu0 0.0
          %741 = vmatprep.subr.mxu0 0.0
          %742 = vmatpush1.msra.mxu0 0.0
          %743 = vmatprep.subr.mxu0 0.0
          %744 = vmatpush1.msra.mxu0 0.0
          %745 = vmatprep.subr.mxu0 0.0
          %746 = vmatpush1.msra.mxu0 0.0
          %747 = vmatprep.subr.mxu0 0.0
          %748 = vmatpush1.msra.mxu0 0.0
          %749 = vmatprep.subr.mxu0 0.0
          %750 = vmatpush1.msra.mxu0 0.0
          %751 = vmatprep.subr.mxu0 0.0
          %752 = vmatpush1.msra.mxu0 0.0
          %753 = vmatprep.subr.mxu0 0.0
          %754 = vmatpush1.msra.mxu0 0.0
          %755 = vmatprep.subr.mxu0 0.0
          %756 = vmatpush1.msra.mxu0 0.0
          %757 = vmatprep.subr.mxu0 0.0
          %758 = vmatpush1.msra.mxu0 0.0
          %759 = vmatprep.subr.mxu0 0.0
          %760 = vmatpush1.msra.mxu0 0.0
          %761 = vmatprep.subr.mxu0 0.0
          %762 = vmatpush1.msra.mxu0 0.0
          %763 = vmatprep.subr.mxu0 0.0
          %764 = vmatpush1.msra.mxu0 0.0
          %765 = vmatprep.subr.mxu0 0.0
          %766 = vmatpush1.msra.mxu0 0.0
          %767 = vmatprep.subr.mxu0 0.0
          %768 = vmatpush1.msra.mxu0 0.0
          %769 = vmatprep.subr.mxu0 0.0
          %770 = vmatpush1.msra.mxu0 0.0
          %771 = vmatprep.subr.mxu0 0.0
          %772 = vmatpush1.msra.mxu0 0.0
          %773 = vmatprep.subr.mxu0 0.0
          %774 = vmatpush1.msra.mxu0 0.0
          %775 = vmatprep.subr.mxu0 0.0
          %776 = vmatpush1.msra.mxu0 0.0
          %777 = vmatprep.subr.mxu0 0.0
          %778 = vmatpush1.msra.mxu0 0.0
          %779 = vmatprep.subr.mxu0 0.0
          %780 = vmatpush1.msra.mxu0 0.0
          %781 = vmatprep.subr.mxu0 0.0
          %782 = vmatpush1.msra.mxu0 0.0
          %783 = vmatprep.subr.mxu0 0.0
          %784 = vmatpush1.msra.mxu0 0.0
          %785 = vmatprep.subr.mxu0 0.0
          %786 = vmatpush1.msra.mxu0 0.0
          %787 = vmatprep.subr.mxu0 0.0
          %788 = vmatpush1.msra.mxu0 0.0
          %789 = vmatprep.mubr.f32.mxu0 0.0
          %790 = vmatmul.mubr.f32.gmra.mrb[0].mxu0 %v721
          %v791 = vpop.f32.mrb[0].mxu0
          %v792 = vadd.f32 0.0, %v791
          %v793 = vpop.f32.mrb[0].mxu0
          %794 = vdwg.mxu0
          %v795 = vadd.f32 %v715, %v792
          %s796 = sadd.s32 %s286, 2
          %s797 = scalar_lea.vmem %s226, %s796 [#allocation2]
          %v798 = vld [vmem:[%s797] sm:$0x1]
          %v799 = vld [vmem:[%s797 + $0x18] sm:$0x1]
          %v800 = vld [vmem:[%s797 + $0x30] sm:$0x1]
          %v801 = vld [vmem:[%s797 + $0x48] sm:$0x1]
          %s802 = scalar_lea.vmem %s235, 48 [#allocation5]
          %v803 = vld [vmem:[%s802] sm:$0xff]
          %v808 = vrot.slane %v799, 7
          %v809 = vsel %vm300, %v808, %v798
          %v810 = vrot.slane %v800, 6
          %v811 = vsel %vm303, %v810, %v809
          %v812 = vrot.slane %v801, 5
          %v813 = vsel %vm306, %v812, %v811
          %v815 = vsel %vm310, %v803, 0
          %v817 = vsel %vm314, %v813, 0
          %819 = vmatprep.subr.mxu0 0.0
          %820 = vmatpush1.msra.mxu0 %v817
          %821 = vmatprep.subr.mxu0 0.0
          %822 = vmatpush1.msra.mxu0 0.0
          %823 = vmatprep.subr.mxu0 0.0
          %824 = vmatpush1.msra.mxu0 0.0
          %825 = vmatprep.subr.mxu0 0.0
          %826 = vmatpush1.msra.mxu0 0.0
          %827 = vmatprep.subr.mxu0 0.0
          %828 = vmatpush1.msra.mxu0 0.0
          %829 = vmatprep.subr.mxu0 0.0
          %830 = vmatpush1.msra.mxu0 0.0
          %831 = vmatprep.subr.mxu0 0.0
          %832 = vmatpush1.msra.mxu0 0.0
          %833 = vmatprep.subr.mxu0 0.0
          %834 = vmatpush1.msra.mxu0 0.0
          %835 = vmatprep.subr.mxu0 0.0
          %836 = vmatpush1.msra.mxu0 0.0
          %837 = vmatprep.subr.mxu0 0.0
          %838 = vmatpush1.msra.mxu0 0.0
          %839 = vmatprep.subr.mxu0 0.0
          %840 = vmatpush1.msra.mxu0 0.0
          %841 = vmatprep.subr.mxu0 0.0
          %842 = vmatpush1.msra.mxu0 0.0
          %843 = vmatprep.subr.mxu0 0.0
          %844 = vmatpush1.msra.mxu0 0.0
          %845 = vmatprep.subr.mxu0 0.0
          %846 = vmatpush1.msra.mxu0 0.0
          %847 = vmatprep.subr.mxu0 0.0
          %848 = vmatpush1.msra.mxu0 0.0
          %849 = vmatprep.subr.mxu0 0.0
          %850 = vmatpush1.msra.mxu0 0.0
          %851 = vmatprep.subr.mxu0 0.0
          %852 = vmatpush1.msra.mxu0 0.0
          %853 = vmatprep.subr.mxu0 0.0
          %854 = vmatpush1.msra.mxu0 0.0
          %855 = vmatprep.subr.mxu0 0.0
          %856 = vmatpush1.msra.mxu0 0.0
          %857 = vmatprep.subr.mxu0 0.0
          %858 = vmatpush1.msra.mxu0 0.0
          %859 = vmatprep.subr.mxu0 0.0
          %860 = vmatpush1.msra.mxu0 0.0
          %861 = vmatprep.subr.mxu0 0.0
          %862 = vmatpush1.msra.mxu0 0.0
          %863 = vmatprep.subr.mxu0 0.0
          %864 = vmatpush1.msra.mxu0 0.0
          %865 = vmatprep.subr.mxu0 0.0
          %866 = vmatpush1.msra.mxu0 0.0
          %867 = vmatprep.subr.mxu0 0.0
          %868 = vmatpush1.msra.mxu0 0.0
          %869 = vmatprep.subr.mxu0 0.0
          %870 = vmatpush1.msra.mxu0 0.0
          %871 = vmatprep.subr.mxu0 0.0
          %872 = vmatpush1.msra.mxu0 0.0
          %873 = vmatprep.subr.mxu0 0.0
          %874 = vmatpush1.msra.mxu0 0.0
          %875 = vmatprep.subr.mxu0 0.0
          %876 = vmatpush1.msra.mxu0 0.0
          %877 = vmatprep.subr.mxu0 0.0
          %878 = vmatpush1.msra.mxu0 0.0
          %879 = vmatprep.subr.mxu0 0.0
          %880 = vmatpush1.msra.mxu0 0.0
          %881 = vmatprep.subr.mxu0 0.0
          %882 = vmatpush1.msra.mxu0 0.0
          %883 = vmatprep.mubr.f32.mxu0 0.0
          %884 = vmatmul.mubr.f32.gmra.mrb[0].mxu0 %v815
          %v885 = vpop.f32.mrb[0].mxu0
          %v886 = vadd.f32 0.0, %v885
          %v887 = vpop.f32.mrb[0].mxu0
          %888 = vdwg.mxu0
          %v889 = vadd.f32 %v795, %v886
          %s890 = scalar_lea.vmem %s235, 56 [#allocation5]
          %v891 = vld [vmem:[%s890] sm:$0xff]
          %892 = vrot.lane.b32.xlu0 %v813, 127
          %v893 = vpop.permute.xlu0 %892
          %v895 = vsel %vm310, %v891, 0
          %v897 = vsel %vm314, %v893, 0
          %899 = vmatprep.subr.mxu0 0.0
          %900 = vmatpush1.msra.mxu0 %v897
          %901 = vmatprep.subr.mxu0 0.0
          %902 = vmatpush1.msra.mxu0 0.0
          %903 = vmatprep.subr.mxu0 0.0
          %904 = vmatpush1.msra.mxu0 0.0
          %905 = vmatprep.subr.mxu0 0.0
          %906 = vmatpush1.msra.mxu0 0.0
          %907 = vmatprep.subr.mxu0 0.0
          %908 = vmatpush1.msra.mxu0 0.0
          %909 = vmatprep.subr.mxu0 0.0
          %910 = vmatpush1.msra.mxu0 0.0
          %911 = vmatprep.subr.mxu0 0.0
          %912 = vmatpush1.msra.mxu0 0.0
          %913 = vmatprep.subr.mxu0 0.0
          %914 = vmatpush1.msra.mxu0 0.0
          %915 = vmatprep.subr.mxu0 0.0
          %916 = vmatpush1.msra.mxu0 0.0
          %917 = vmatprep.subr.mxu0 0.0
          %918 = vmatpush1.msra.mxu0 0.0
          %919 = vmatprep.subr.mxu0 0.0
          %920 = vmatpush1.msra.mxu0 0.0
          %921 = vmatprep.subr.mxu0 0.0
          %922 = vmatpush1.msra.mxu0 0.0
          %923 = vmatprep.subr.mxu0 0.0
          %924 = vmatpush1.msra.mxu0 0.0
          %925 = vmatprep.subr.mxu0 0.0
          %926 = vmatpush1.msra.mxu0 0.0
          %927 = vmatprep.subr.mxu0 0.0
          %928 = vmatpush1.msra.mxu0 0.0
          %929 = vmatprep.subr.mxu0 0.0
          %930 = vmatpush1.msra.mxu0 0.0
          %931 = vmatprep.subr.mxu0 0.0
          %932 = vmatpush1.msra.mxu0 0.0
          %933 = vmatprep.subr.mxu0 0.0
          %934 = vmatpush1.msra.mxu0 0.0
          %935 = vmatprep.subr.mxu0 0.0
          %936 = vmatpush1.msra.mxu0 0.0
          %937 = vmatprep.subr.mxu0 0.0
          %938 = vmatpush1.msra.mxu0 0.0
          %939 = vmatprep.subr.mxu0 0.0
          %940 = vmatpush1.msra.mxu0 0.0
          %941 = vmatprep.subr.mxu0 0.0
          %942 = vmatpush1.msra.mxu0 0.0
          %943 = vmatprep.subr.mxu0 0.0
          %944 = vmatpush1.msra.mxu0 0.0
          %945 = vmatprep.subr.mxu0 0.0
          %946 = vmatpush1.msra.mxu0 0.0
          %947 = vmatprep.subr.mxu0 0.0
          %948 = vmatpush1.msra.mxu0 0.0
          %949 = vmatprep.subr.mxu0 0.0
          %950 = vmatpush1.msra.mxu0 0.0
          %951 = vmatprep.subr.mxu0 0.0
          %952 = vmatpush1.msra.mxu0 0.0
          %953 = vmatprep.subr.mxu0 0.0
          %954 = vmatpush1.msra.mxu0 0.0
          %955 = vmatprep.subr.mxu0 0.0
          %956 = vmatpush1.msra.mxu0 0.0
          %957 = vmatprep.subr.mxu0 0.0
          %958 = vmatpush1.msra.mxu0 0.0
          %959 = vmatprep.subr.mxu0 0.0
          %960 = vmatpush1.msra.mxu0 0.0
          %961 = vmatprep.subr.mxu0 0.0
          %962 = vmatpush1.msra.mxu0 0.0
          %963 = vmatprep.mubr.f32.mxu0 0.0
          %964 = vmatmul.mubr.f32.gmra.mrb[0].mxu0 %v895
          %v965 = vpop.f32.mrb[0].mxu0
          %v966 = vadd.f32 0.0, %v965
          %v967 = vpop.f32.mrb[0].mxu0
          %968 = vdwg.mxu0
          %v969 = vadd.f32 %v889, %v966
          %s970 = scalar_lea.vmem %s235, 64 [#allocation5]
          %v971 = vld [vmem:[%s970] sm:$0xff]
          %972 = vrot.lane.b32.xlu0 %v813, 126
          %v973 = vpop.permute.xlu0 %972
          %v975 = vsel %vm310, %v971, 0
          %v977 = vsel %vm314, %v973, 0
          %979 = vmatprep.subr.mxu0 0.0
          %980 = vmatpush1.msra.mxu0 %v977
          %981 = vmatprep.subr.mxu0 0.0
          %982 = vmatpush1.msra.mxu0 0.0
          %983 = vmatprep.subr.mxu0 0.0
          %984 = vmatpush1.msra.mxu0 0.0
          %985 = vmatprep.subr.mxu0 0.0
          %986 = vmatpush1.msra.mxu0 0.0
          %987 = vmatprep.subr.mxu0 0.0
          %988 = vmatpush1.msra.mxu0 0.0
          %989 = vmatprep.subr.mxu0 0.0
          %990 = vmatpush1.msra.mxu0 0.0
          %991 = vmatprep.subr.mxu0 0.0
          %992 = vmatpush1.msra.mxu0 0.0
          %993 = vmatprep.subr.mxu0 0.0
          %994 = vmatpush1.msra.mxu0 0.0
          %995 = vmatprep.subr.mxu0 0.0
          %996 = vmatpush1.msra.mxu0 0.0
          %997 = vmatprep.subr.mxu0 0.0
          %998 = vmatpush1.msra.mxu0 0.0
          %999 = vmatprep.subr.mxu0 0.0
          %1000 = vmatpush1.msra.mxu0 0.0
          %1001 = vmatprep.subr.mxu0 0.0
          %1002 = vmatpush1.msra.mxu0 0.0
          %1003 = vmatprep.subr.mxu0 0.0
          %1004 = vmatpush1.msra.mxu0 0.0
          %1005 = vmatprep.subr.mxu0 0.0
          %1006 = vmatpush1.msra.mxu0 0.0
          %1007 = vmatprep.subr.mxu0 0.0
          %1008 = vmatpush1.msra.mxu0 0.0
          %1009 = vmatprep.subr.mxu0 0.0
          %1010 = vmatpush1.msra.mxu0 0.0
          %1011 = vmatprep.subr.mxu0 0.0
          %1012 = vmatpush1.msra.mxu0 0.0
          %1013 = vmatprep.subr.mxu0 0.0
          %1014 = vmatpush1.msra.mxu0 0.0
          %1015 = vmatprep.subr.mxu0 0.0
          %1016 = vmatpush1.msra.mxu0 0.0
          %1017 = vmatprep.subr.mxu0 0.0
          %1018 = vmatpush1.msra.mxu0 0.0
          %1019 = vmatprep.subr.mxu0 0.0
          %1020 = vmatpush1.msra.mxu0 0.0
          %1021 = vmatprep.subr.mxu0 0.0
          %1022 = vmatpush1.msra.mxu0 0.0
          %1023 = vmatprep.subr.mxu0 0.0
          %1024 = vmatpush1.msra.mxu0 0.0
          %1025 = vmatprep.subr.mxu0 0.0
          %1026 = vmatpush1.msra.mxu0 0.0
          %1027 = vmatprep.subr.mxu0 0.0
          %1028 = vmatpush1.msra.mxu0 0.0
          %1029 = vmatprep.subr.mxu0 0.0
          %1030 = vmatpush1.msra.mxu0 0.0
          %1031 = vmatprep.subr.mxu0 0.0
          %1032 = vmatpush1.msra.mxu0 0.0
          %1033 = vmatprep.subr.mxu0 0.0
          %1034 = vmatpush1.msra.mxu0 0.0
          %1035 = vmatprep.subr.mxu0 0.0
          %1036 = vmatpush1.msra.mxu0 0.0
          %1037 = vmatprep.subr.mxu0 0.0
          %1038 = vmatpush1.msra.mxu0 0.0
          %1039 = vmatprep.subr.mxu0 0.0
          %1040 = vmatpush1.msra.mxu0 0.0
          %1041 = vmatprep.subr.mxu0 0.0
          %1042 = vmatpush1.msra.mxu0 0.0
          %1043 = vmatprep.mubr.f32.mxu0 0.0
          %1044 = vmatmul.mubr.f32.gmra.mrb[0].mxu0 %v975
          %v1045 = vpop.f32.mrb[0].mxu0
          %v1046 = vadd.f32 0.0, %v1045
          %v1047 = vpop.f32.mrb[0].mxu0
          %1048 = vdwg.mxu0
          %v1049 = vadd.f32 %v969, %v1046
          %1051 = vset.pattern.permute.xlu0 0
          %1052 = vperm.xlu0 %1051, %v279
          %v1053 = vpop.permute.xlu0 %1052
          %v1055 = vadd.f32 %v1049, %v1053
          %v1057 = vcombine.high %v1055, %v1055
          %v1059 = vunpack.c.l.s4 1966171168
          %v1060 = vunpack.c.0.s8 %v1059
          %v1061 = vlaneseq
          %v1062 = vshrl.u32 %v1061, 7
          %v1063 = vsub.s32 %v1060, %v1062
          %v1064 = vrot.slane %v1055, %v1063
          %v1066 = vunpack.c.l.s4 1966171168
          %v1067 = vunpack.c.0.s8 %v1066
          %v1068 = vlaneseq
          %v1069 = vshrl.u32 %v1068, 7
          %v1070 = vsub.s32 %v1067, %v1069
          %v1071 = vrot.slane %v1057, %v1070
          %v1072 = vcombine.high %v1064, %v1064
          %v1073 = vcombine.high %v1071, %v1071
          %v1075 = vunpack.c.l.s4 1966171168
          %v1076 = vunpack.c.0.s8 %v1075
          %v1077 = vlaneseq
          %v1078 = vshrl.u32 %v1077, 7
          %v1079 = vsub.s32 %v1076, %v1078
          %v1080 = vrot.slane %v1064, %v1079
          %v1082 = vunpack.c.l.s4 1966171168
          %v1083 = vunpack.c.0.s8 %v1082
          %v1084 = vlaneseq
          %v1085 = vshrl.u32 %v1084, 7
          %v1086 = vsub.s32 %v1083, %v1085
          %v1087 = vrot.slane %v1071, %v1086
          %v1089 = vunpack.c.l.s4 1966171168
          %v1090 = vunpack.c.0.s8 %v1089
          %v1091 = vlaneseq
          %v1092 = vshrl.u32 %v1091, 7
          %v1093 = vsub.s32 %v1090, %v1092
          %v1094 = vrot.slane %v1072, %v1093
          %v1096 = vunpack.c.l.s4 1966171168
          %v1097 = vunpack.c.0.s8 %v1096
          %v1098 = vlaneseq
          %v1099 = vshrl.u32 %v1098, 7
          %v1100 = vsub.s32 %v1097, %v1099
          %v1101 = vrot.slane %v1073, %v1100
          %v1102 = vcombine.high %v1080, %v1080
          %v1103 = vcombine.high %v1087, %v1087
          %v1104 = vcombine.high %v1094, %v1094
          %v1105 = vcombine.high %v1101, %v1101
          %s1114 = scalar_lea.vmem %s276, %s281 [#allocation8]
          %vm1115 = vcmask 122880
          %1116 = vst.msk [vmem:[%s1114] sm:$0x1] %vm1115, %v1080
          %1117 = vst.msk [vmem:[%s1114 + $0x10] sm:$0x1] %vm1115, %v1094
          %1118 = vst.msk [vmem:[%s1114 + $0x20] sm:$0x1] %vm1115, %v1102
          %1119 = vst.msk [vmem:[%s1114 + $0x30] sm:$0x1] %vm1115, %v1104
          %1120 = vst.msk [vmem:[%s1114 + $0x40] sm:$0x1] %vm1115, %v1087
          %1121 = vst.msk [vmem:[%s1114 + $0x50] sm:$0x1] %vm1115, %v1101
          %1122 = vst.msk [vmem:[%s1114 + $0x60] sm:$0x1] %vm1115, %v1103
          %1123 = vst.msk [vmem:[%s1114 + $0x70] sm:$0x1] %vm1115, %v1105
        $region49: #{a_call__.1} parent=31 // loop_footer
          %s285 = sadd.s32 1, %s281
        $region50: #{a_call__.1} parent=31 // loop_footer_branch
          %280 = sbr.rel target = $region46
        $region51: #{a_call__.1} parent=31 // loop_exit
          _
        %s1124 = sand.u32 %s123, 1
        %s1125 = scalar_lea.sflag [#allocation4], %s1124
        %s1126 = sand.u32 %s123, 1
        %s1127 = smul.addr %s1126, 128
        %s1128 = scalar_lea.vmem [#allocation8], %s1127
        // Predicated region
        $region52: #{a_call__.1} parent=31 // pred_check
          %p1129 = pneg %p133
        $region53: #{a_call__.1} parent=31 // pred_check_branch
          %1131 = sbr.rel (%p1129) target = $region55
        $region54: #{a_call__.1} parent=31 // pred_region
          %s1132 = smul.u32 2, %s28
          %s1134 = ssub.s32 2048, 2048
          %1135 = vsyncadd %s1125, %s1134
          %s1136 = smul.addr %s27, 16
          %s1137 = sadd.s32 %s1132, %s1136
          %s1138 = smul.addr %s1137, 128
          %s1139 = scalar_lea.hbm %s3, %s1138
          %s1140 = sshll.u32 %s1128, 4
          %s1141 = int_to_ptr.vmem [resolvable:$true] %s1140
          %1146 = dma.vmem_to_hbm [thread:$0]  %s1141, 2048, %s1139, %s1125, 128, 128, 8
        $region55: #{a_call__.1} parent=31 // pred_fallthru
          _
      $region32: #{a_call__.1} parent=5 // pred_fallthru
        _
      %p1147 = scmp.le.s32.totalorder 2, %s18
      // Predicated region
      $region56: #{a_call__.1} parent=5 // pred_check
        %p1148 = pneg %p1147
      $region57: #{a_call__.1} parent=5 // pred_check_branch
        %1150 = sbr.rel (%p1148) target = $region59
      $region58: #{a_call__.1} parent=5 // pred_region
        %s1151 = ssub.s32 %s18, 2
        // Predicated region
        $region60: #{a_call__.1} parent=58 // pred_check
          %p1152 = pneg %p139
        $region61: #{a_call__.1} parent=58 // pred_check_branch
          %1154 = sbr.rel (%p1152) target = $region63
        $region62: #{a_call__.1} parent=58 // pred_region
          %s1155 = sand.u32 %s124, 1
          %s1156 = scalar_lea.sflag [#allocation4], %s1155
          %s1157 = sand.u32 %s124, 1
          %s1158 = smul.addr %s1157, 128
          %s1159 = scalar_lea.vmem [#allocation8], %s1158
          %1160 = dma.done %s1156, 2048
        $region63: #{a_call__.1} parent=58 // pred_fallthru
          _
      $region59: #{a_call__.1} parent=5 // pred_fallthru
        _
    $region6: #{a_call__.1} parent=1 // loop_footer
      %s22 = sadd.s32 1, %s18
    $region7: #{a_call__.1} parent=1 // loop_footer_branch
      %17 = sbr.rel target = $region3
    $region8: #{a_call__.1} parent=1 // loop_exit
      _
    %1161 = vsyncpa [#allocation3], 1
    %s1162 = scalar_lea.sflag [#allocation3], 1
    %1163 = vsyncpa %s1162, 1
    %1164 = vsyncpa [#allocation6], 1
    %s1165 = scalar_lea.sflag [#allocation6], 1
    %1166 = vsyncpa %s1165, 1
    %1167 = vsyncpa [#allocation4], 1
    %s1168 = scalar_lea.sflag [#allocation4], 1
    %1169 = vsyncpa %s1168, 1

</llo_original>
